<compile_context>
chip_gen: v7x
topology: tpu7x:2x2x1
jax: 0.10.0
libtpu: 0.0.40
codegen_flags: <defaults>
</compile_context>

<pallas_src>
import jax
import jax.numpy as jnp
from jax.experimental import pallas as pl
from jax.experimental.pallas import tpu as pltpu

LANE = 128          # lane width: keep last dims lane-dense multiples of this
TILE_M = 128        # dst-row tile size
NEG = -1e30         # non-edge sentinel (real logits are O(1)); representable in bf16
MASK_THRESH = -1e29 # entries above this are real edges


def _round_up(x, m):
    return (x + m - 1) // m * m


def _pad2(x, rows, cols):
    return jnp.pad(x, ((0, rows - x.shape[0]), (0, cols - x.shape[1])))


# ---------------------------------------------------------------------------
# Pass 1: hv = Linear(node_feats)   (project_node; Dropout == identity at eval)
# ---------------------------------------------------------------------------
def _project_node_kernel(h_ref, wp_ref, bp_ref, hv_ref):
    h = h_ref[...].astype(jnp.bfloat16)                                  # (TM, Fp)
    hv = jnp.dot(h, wp_ref[...], preferred_element_type=jnp.float32)     # bf16 MXU, f32 acc
    hv = hv + bp_ref[0:1, :]
    hv_ref[...] = hv.astype(jnp.bfloat16)                                # bf16: reused as MXU operand


# ---------------------------------------------------------------------------
# Pass 2: edge softmax + message passing + fused GRUCell + ReLU
# ---------------------------------------------------------------------------
def _attentive_gru2_kernel(ml_ref, h_ref, hv_ref, wi_ref, wh_ref, b_ref, out_ref):
    Fp = h_ref.shape[1]

    masked = ml_ref[...].astype(jnp.float32)                             # (TM, Np) bf16 -> f32
    mask = masked > MASK_THRESH                                          # real-edge mask
    h = h_ref[...]                                                       # (TM, Fp) f32

    # ---- edge_softmax over incoming edges (masked row softmax) ----
    row_max = jnp.max(masked, axis=-1, keepdims=True)
    p = jnp.exp(masked - row_max)                                        # non-edges underflow to 0
    denom = jnp.maximum(jnp.sum(p, axis=-1, keepdims=True), 1e-9)
    a = p / denom
    # e = a + 1 on existing edges only
    e = jnp.where(mask, a + 1.0, 0.0).astype(jnp.bfloat16)               # (TM, Np)

    # ---- message passing: c[dst] = sum_src e[dst,src] * hv[src] == e @ hv ----
    c = jnp.dot(e, hv_ref[...], preferred_element_type=jnp.float32)      # (TM, Ep)

    # ---- ELU (clamp before exp: no overflow on the positive branch) ----
    context = jnp.where(c > 0.0, c, jnp.exp(jnp.minimum(c, 0.0)) - 1.0)

    # ---- fused GRUCell matmuls: gi = ctx @ [W_ir|W_iz|W_in], gh = h @ [W_hr|W_hz|W_hn] ----
    gi = jnp.dot(context.astype(jnp.bfloat16), wi_ref[...],
                 preferred_element_type=jnp.float32)                     # (TM, 3Fp)
    gh = jnp.dot(h.astype(jnp.bfloat16), wh_ref[...],
                 preferred_element_type=jnp.float32)                     # (TM, 3Fp)

    b = b_ref[...]                        # (8, Fp): rows 0..3 = [b_ir+b_hr, b_iz+b_hz, b_in, b_hn]
    r = jax.nn.sigmoid(gi[:, 0:Fp] + gh[:, 0:Fp] + b[0:1, :])
    z = jax.nn.sigmoid(gi[:, Fp:2 * Fp] + gh[:, Fp:2 * Fp] + b[1:2, :])
    n = jnp.tanh(gi[:, 2 * Fp:3 * Fp] + b[2:3, :] + r * (gh[:, 2 * Fp:3 * Fp] + b[3:4, :]))
    h_new = (1.0 - z) * n + z * h

    out_ref[...] = jnp.maximum(h_new, 0.0)                               # ReLU, lane-dense (TM, Fp)


# ---------------------------------------------------------------------------
# Wrapper: padding / dtype repacking / weight fusion (zero in-kernel cost)
# ---------------------------------------------------------------------------
def attentive_gru2(adj, logits, node_feats, params):
    N, F = node_feats.shape
    E = params["w_proj"].shape[1]
    Fp = _round_up(F, LANE)
    Ep = _round_up(E, LANE)
    TM = TILE_M
    Np = _round_up(N, TM)
    n_tiles = Np // TM

    cp = pltpu.CompilerParams(dimension_semantics=("parallel",),
                              vmem_limit_bytes=48 * 1024 * 1024)

    # ---- lane-dense padding; adj + logits fused into one bf16 O(N^2) input ----
    h_pad = _pad2(node_feats.astype(jnp.float32), Np, Fp)                 # (Np, Fp) f32
    adj_pad = _pad2(adj, Np, Np)
    logits_pad = _pad2(logits, Np, Np)
    masked_logits = jnp.where(adj_pad > 0, logits_pad, NEG).astype(jnp.bfloat16)   # (Np, Np) bf16

    wp = _pad2(params["w_proj"], Fp, Ep).astype(jnp.bfloat16)             # (Fp, Ep)
    bp = _pad2(params["b_proj"], 8, Ep).astype(jnp.float32)               # (8, Ep), row 0 real

    # fuse the six GRU weight matrices into two wide ones (3x MXU column utilization)
    w_i = jnp.concatenate([_pad2(params["w_ir"], Ep, Fp),
                           _pad2(params["w_iz"], Ep, Fp),
                           _pad2(params["w_in"], Ep, Fp)], axis=1).astype(jnp.bfloat16)   # (Ep, 3Fp)
    w_h = jnp.concatenate([_pad2(params["w_hr"], Fp, Fp),
                           _pad2(params["w_hz"], Fp, Fp),
                           _pad2(params["w_hn"], Fp, Fp)], axis=1).astype(jnp.bfloat16)   # (Fp, 3Fp)
    b_all = jnp.concatenate([
        _pad2(params["b_ir"] + params["b_hr"], 1, Fp),   # r-gate bias fold
        _pad2(params["b_iz"] + params["b_hz"], 1, Fp),   # z-gate bias fold
        _pad2(params["b_in"], 1, Fp),                    # kept separate for the n-gate
        _pad2(params["b_hn"], 1, Fp)], axis=0)
    b_all = jnp.pad(b_all, ((0, 4), (0, 0))).astype(jnp.float32)          # (8, Fp) sublane-dense

    # ---- pass 1: hv computed once over src tiles (parallel grid), stored bf16 ----
    hv = pl.pallas_call(
        _project_node_kernel,
        out_shape=jax.ShapeDtypeStruct((Np, Ep), jnp.bfloat16),
        grid=(n_tiles,),
        in_specs=[pl.BlockSpec((TM, Fp), lambda i: (i, 0)),
                  pl.BlockSpec((Fp, Ep), lambda i: (0, 0)),
                  pl.BlockSpec((8, Ep), lambda i: (0, 0))],
        out_specs=pl.BlockSpec((TM, Ep), lambda i: (i, 0)),
        compiler_params=cp,
    )(h_pad, wp, bp)

    # ---- pass 2: per dst-row tile; weights + hv resident, masked logits tiled & pipelined ----
    out_pad = pl.pallas_call(
        _attentive_gru2_kernel,
        out_shape=jax.ShapeDtypeStruct((Np, Fp), jnp.float32),
        grid=(n_tiles,),
        in_specs=[pl.BlockSpec((TM, Np), lambda i: (i, 0)),       # masked logits (dst tile, all src)
                  pl.BlockSpec((TM, Fp), lambda i: (i, 0)),       # node_feats (dst tile, GRU hidden)
                  pl.BlockSpec((Np, Ep), lambda i: (0, 0)),       # hv (all src, resident)
                  pl.BlockSpec((Ep, 3 * Fp), lambda i: (0, 0)),   # fused W_i
                  pl.BlockSpec((Fp, 3 * Fp), lambda i: (0, 0)),   # fused W_h
                  pl.BlockSpec((8, Fp), lambda i: (0, 0))],       # fused biases
        out_specs=pl.BlockSpec((TM, Fp), lambda i: (i, 0)),
        compiler_params=cp,
    )(masked_logits, h_pad, hv, w_i, w_h, b_all)

    return out_pad[:N, :F]


# ---------------------------------------------------------------------------
# References
# ---------------------------------------------------------------------------
def reference_bf16_matched(adj, logits, node_feats, p):
    """Same math / same bf16 cast points as the kernel (near-tight check)."""
    bf, f32 = jnp.bfloat16, jnp.float32
    masked = jnp.where(adj > 0, logits, NEG).astype(bf).astype(f32)
    mask = masked > MASK_THRESH
    pm = jnp.exp(masked - jnp.max(masked, axis=-1, keepdims=True))
    denom = jnp.maximum(jnp.sum(pm, axis=-1, keepdims=True), 1e-9)
    a = pm / denom
    e = jnp.where(mask, a + 1.0, 0.0).astype(bf)
    hv = (jnp.dot(node_feats.astype(bf), p["w_proj"].astype(bf),
                  preferred_element_type=f32) + p["b_proj"]).astype(bf)
    c = jnp.dot(e, hv, preferred_element_type=f32)
    ctx = jnp.where(c > 0.0, c, jnp.exp(jnp.minimum(c, 0.0)) - 1.0)
    ctx_bf = ctx.astype(bf)
    h_bf = node_feats.astype(bf)
    gi_r = jnp.dot(ctx_bf, p["w_ir"].astype(bf), preferred_element_type=f32)
    gi_z = jnp.dot(ctx_bf, p["w_iz"].astype(bf), preferred_element_type=f32)
    gi_n = jnp.dot(ctx_bf, p["w_in"].astype(bf), preferred_element_type=f32)
    gh_r = jnp.dot(h_bf, p["w_hr"].astype(bf), preferred_element_type=f32)
    gh_z = jnp.dot(h_bf, p["w_hz"].astype(bf), preferred_element_type=f32)
    gh_n = jnp.dot(h_bf, p["w_hn"].astype(bf), preferred_element_type=f32)
    r = jax.nn.sigmoid(gi_r + gh_r + (p["b_ir"] + p["b_hr"]))
    z = jax.nn.sigmoid(gi_z + gh_z + (p["b_iz"] + p["b_hz"]))
    n = jnp.tanh(gi_n + p["b_in"] + r * (gh_n + p["b_hn"]))
    return jnp.maximum((1.0 - z) * n + z * node_feats, 0.0)


def reference_f32(adj, logits, node_feats, p):
    """Pure f32 module semantics (loose-tolerance sanity check vs bf16 kernel)."""
    mask = adj > 0
    masked = jnp.where(mask, logits, NEG)
    pm = jnp.exp(masked - jnp.max(masked, axis=-1, keepdims=True))
    a = pm / jnp.maximum(jnp.sum(pm, axis=-1, keepdims=True), 1e-9)
    e = jnp.where(mask, a + 1.0, 0.0)
    hv = node_feats @ p["w_proj"] + p["b_proj"]
    c = e @ hv
    ctx = jnp.where(c > 0.0, c, jnp.exp(jnp.minimum(c, 0.0)) - 1.0)
    gi_r = ctx @ p["w_ir"] + p["b_ir"]
    gi_z = ctx @ p["w_iz"] + p["b_iz"]
    gi_n = ctx @ p["w_in"] + p["b_in"]
    gh_r = node_feats @ p["w_hr"] + p["b_hr"]
    gh_z = node_feats @ p["w_hz"] + p["b_hz"]
    gh_n = node_feats @ p["w_hn"] + p["b_hn"]
    r = jax.nn.sigmoid(gi_r + gh_r)
    z = jax.nn.sigmoid(gi_z + gh_z)
    n = jnp.tanh(gi_n + r * gh_n)
    return jnp.maximum((1.0 - z) * n + z * node_feats, 0.0)


if __name__ == "__main__":
    N = 16                 # number of nodes
    F = 32                 # node_feat_size (== GRU hidden size)
    E = 64                 # edge_hidden_size

    key = jax.random.PRNGKey(0)
    keys = jax.random.split(key, 16)

    # Graph: random sparse adjacency + self loops (every dst has >=1 in-edge).
    adj = (jax.random.uniform(keys[0], (N, N)) < 0.3).astype(jnp.float32)
    adj = jnp.maximum(adj, jnp.eye(N, dtype=jnp.float32))          # (dst, src)
    logits = jax.random.normal(keys[1], (N, N), dtype=jnp.float32)
    node_feats = jax.random.normal(keys[2], (N, F), dtype=jnp.float32)

    s = 0.1
    params = {
        "w_proj": s * jax.random.normal(keys[3], (F, E), jnp.float32),
        "b_proj": s * jax.random.normal(keys[4], (1, E), jnp.float32),
        "w_ir": s * jax.random.normal(keys[5], (E, F), jnp.float32),
        "w_iz": s * jax.random.normal(keys[6], (E, F), jnp.float32),
        "w_in": s * jax.random.normal(keys[7], (E, F), jnp.float32),
        "w_hr": s * jax.random.normal(keys[8], (F, F), jnp.float32),
        "w_hz": s * jax.random.normal(keys[9], (F, F), jnp.float32),
        "w_hn": s * jax.random.normal(keys[10], (F, F), jnp.float32),
        "b_ir": s * jax.random.normal(keys[11], (1, F), jnp.float32),
        "b_iz": s * jax.random.normal(keys[12], (1, F), jnp.float32),
        "b_in": s * jax.random.normal(keys[13], (1, F), jnp.float32),
        "b_hr": s * jax.random.normal(keys[14], (1, F), jnp.float32),
        "b_hz": s * jax.random.normal(keys[15], (1, F), jnp.float32),
        "b_hn": jnp.zeros((1, F), jnp.float32),
    }

    out = jax.block_until_ready(attentive_gru2(adj, logits, node_feats, params))
    assert out.shape == (N, F)

    # Check vs a reference that mirrors the kernel's bf16 cast points.
    ref_m = reference_bf16_matched(adj, logits, node_feats, params)
    assert jnp.allclose(out, ref_m, rtol=1e-3, atol=5e-3), "mismatch vs bf16-matched reference"

    # Loose check vs pure f32 module semantics (budget = bf16 operand rounding).
    ref_f = reference_f32(adj, logits, node_feats, params)
    assert jnp.allclose(out, ref_f, rtol=1e-1, atol=1e-1), "mismatch vs f32 reference"

    print("KERNEL_OK")
</pallas_src>

<mosaic_0001>
module attributes {stable_mosaic.version = 11 : i64} {
  func.func @_project_node_kernel(%arg0: i32, %arg1: memref<128x128xf32, #tpu.memory_space<vmem>>, %arg2: memref<128x128xbf16, #tpu.memory_space<vmem>>, %arg3: memref<8x128xf32, #tpu.memory_space<vmem>>, %arg4: memref<128x128xbf16, #tpu.memory_space<vmem>>) attributes {dimension_semantics = [#tpu.dimension_semantics<parallel>], iteration_bounds = array<i64: 1>, scalar_prefetch = 0 : i64, scratch_operands = 0 : i64, tpu.core_type = #tpu.core_type<tc>, window_params = [{transform_indices = @transform_0, window_bounds = array<i64: 128, 128>}, {pipeline_mode = #tpu.pipeline_mode<synchronous>, transform_indices = @transform_1, window_bounds = array<i64: 128, 128>}, {pipeline_mode = #tpu.pipeline_mode<synchronous>, transform_indices = @transform_2, window_bounds = array<i64: 8, 128>}, {transform_indices = @transform_3, window_bounds = array<i64: 128, 128>}]} {
    %c0 = arith.constant 0 : index
    %c0_0 = arith.constant 0 : index
    %0 = vector.load %arg1[%c0, %c0_0] : memref<128x128xf32, #tpu.memory_space<vmem>>, vector<128x128xf32>
    %1 = arith.truncf %0 : vector<128x128xf32> to vector<128x128xbf16>
    %c0_1 = arith.constant 0 : index
    %c0_2 = arith.constant 0 : index
    %2 = vector.load %arg2[%c0_1, %c0_2] : memref<128x128xbf16, #tpu.memory_space<vmem>>, vector<128x128xbf16>
    %cst = arith.constant dense<0.000000e+00> : vector<128x128xf32>
    %3 = tpu.matmul %1, %2, %cst {dimension_numbers = #tpu.dot_dimension_numbers<[1], [0], [0], [1], [0, 0, 1, 1], [], []>} : vector<128x128xbf16>, vector<128x128xbf16>, vector<128x128xf32> -> vector<128x128xf32>
    %c0_3 = arith.constant 0 : index
    %c0_4 = arith.constant 0 : index
    %4 = vector.load %arg3[%c0_3, %c0_4] : memref<8x128xf32, #tpu.memory_space<vmem>>, vector<1x128xf32>
    %5 = vector.broadcast %4 : vector<1x128xf32> to vector<128x128xf32>
    %6 = arith.addf %3, %5 : vector<128x128xf32>
    %7 = arith.truncf %6 : vector<128x128xf32> to vector<128x128xbf16>
    %c0_5 = arith.constant 0 : index
    %c0_6 = arith.constant 0 : index
    %8 = vector.load %arg4[%c0_5, %c0_6] : memref<128x128xbf16, #tpu.memory_space<vmem>>, vector<128x128xbf16>
    tpu.vector_store %arg4[%c0_5, %c0_6], %7 {strides = array<i32>} : memref<128x128xbf16, #tpu.memory_space<vmem>>, vector<128x128xbf16>,
    return
  }
  func.func @transform_0(%arg0: i32) -> (i32, i32) {
    %c0_i32 = arith.constant 0 : i32
    %c0_i32_0 = arith.constant 0 : i32
    return %arg0, %c0_i32 : i32, i32
  }
  func.func @transform_1(%arg0: i32) -> (i32, i32) {
    %c0_i32 = arith.constant 0 : i32
    %c0_i32_0 = arith.constant 0 : i32
    %c0_i32_1 = arith.constant 0 : i32
    return %c0_i32, %c0_i32_0 : i32, i32
  }
  func.func @transform_2(%arg0: i32) -> (i32, i32) {
    %c0_i32 = arith.constant 0 : i32
    %c0_i32_0 = arith.constant 0 : i32
    %c0_i32_1 = arith.constant 0 : i32
    return %c0_i32, %c0_i32_0 : i32, i32
  }
  func.func @transform_3(%arg0: i32) -> (i32, i32) {
    %c0_i32 = arith.constant 0 : i32
    %c0_i32_0 = arith.constant 0 : i32
    return %arg0, %c0_i32 : i32, i32
  }
}

</mosaic_0001>

<llo_original>
// kernel: tpu_custom_call.1
$region0: #{tpu_custom_call.1}
  #allocation0 [shape = 'u32[]', space=smem, size = 0x4, offset = 0x4, fixed_abs, tag = 'smem constant byte address 0x4 - core index']
  #allocation1 [shape = 'u32[144,128]{1,0:T(1,128)}', space=vmem, size = 0x12000, scoped, tag = 'internal scratch']
  %s0 = inlined_call_operand.hbm [shape: f32[128,128], index: 0, kind: input, shape index: {}]
  %s1 = inlined_call_operand.hbm [shape: bf16[128,128], index: 1, kind: input, shape index: {}]
  %s2 = inlined_call_operand.hbm [shape: f32[8,128], index: 2, kind: input, shape index: {}]
  %s3 = inlined_call_operand.hbm [shape: bf16[128,128], index: 3, kind: output, shape index: {}]
  %s4 = sld [smem:[#allocation0]]
  $region34: #{tpu_custom_call.1} parent=0
    _
  %s6 = ssub.s32 1, %s4
  %s7 = scalar_select 0, %s6, %s4
  $region1: #{tpu_custom_call.1} parent=0
    #allocation2 [shape = 'u8[65536]{0}', space=vmem, size = 0x10000, scoped, tag = 'input window, operand 0, single buffered']
    #allocation3 [shape = 's32[1]{0}', space=sflag, size = 0x4, scoped, tag = 'scoped memory for tpu_custom_call.1']
    #allocation4 [shape = 's32[1]{0}', space=sflag, size = 0x4, scoped, tag = 'scoped memory for tpu_custom_call.1']
    #allocation5 [shape = 'u8[32768]{0}', space=vmem, size = 0x8000, scoped, tag = 'input window, operand 1, single buffered']
    #allocation6 [shape = 's32[1]{0}', space=sflag, size = 0x4, scoped, tag = 'scoped memory for tpu_custom_call.1']
    #allocation7 [shape = 'u8[4096]{0}', space=vmem, size = 0x1000, scoped, tag = 'input window, operand 2, single buffered']
    #allocation8 [shape = 'u8[32768]{0}', space=vmem, size = 0x8000, scoped, tag = 'output window, operand 0, single buffered']
    %8 = vsyncpa [#allocation3], 0
    %9 = vsyncpa [#allocation6], 0
    %10 = vsyncpa [#allocation4], 0
    // Predicated region
    $region2: #{tpu_custom_call.1} parent=1 // pred_check
      _
    $region3: #{tpu_custom_call.1} parent=1 // pred_check_branch
      %12 = sbr.rel (0) target = $region5
    $region4: #{tpu_custom_call.1} parent=1 // pred_region
      %s14 = ssub.s32 2048, 2048
      %15 = vsyncadd [#allocation3], %s14
      %s16 = sshll.u32 [#allocation2], 4
      %s17 = int_to_ptr.vmem [resolvable:$true] %s16
      %22 = dma.hbm_to_vmem [thread:$0]  %s0, 2048, %s17, [#allocation3], 128, 128, 8
    $region5: #{tpu_custom_call.1} parent=1 // pred_fallthru
      _
    // Predicated region
    $region6: #{tpu_custom_call.1} parent=1 // pred_check
      _
    $region7: #{tpu_custom_call.1} parent=1 // pred_check_branch
      %24 = sbr.rel (0) target = $region9
    $region8: #{tpu_custom_call.1} parent=1 // pred_region
      %s26 = ssub.s32 1024, 1024
      %27 = vsyncadd [#allocation6], %s26
      %s28 = sshll.u32 [#allocation5], 4
      %s29 = int_to_ptr.vmem [resolvable:$true] %s28
      %34 = dma.hbm_to_vmem [thread:$0]  %s1, 1024, %s29, [#allocation6], 64, 64, 4
    $region9: #{tpu_custom_call.1} parent=1 // pred_fallthru
      _
    // Predicated region
    $region10: #{tpu_custom_call.1} parent=1 // pred_check
      _
    $region11: #{tpu_custom_call.1} parent=1 // pred_check_branch
      %36 = sbr.rel (0) target = $region13
    $region12: #{tpu_custom_call.1} parent=1 // pred_region
      %s38 = ssub.s32 128, 128
      %39 = vsyncadd [#allocation6], %s38
      %s41 = sshll.u32 [#allocation7], 4
      %s42 = int_to_ptr.vmem [resolvable:$true] %s41
      %44 = dma.hbm_to_vmem [thread:$0]  %s2, 128, %s42, [#allocation6]
    $region13: #{tpu_custom_call.1} parent=1 // pred_fallthru
      _
    // Predicated region
    $region14: #{tpu_custom_call.1} parent=1 // pred_check
      _
    $region15: #{tpu_custom_call.1} parent=1 // pred_check_branch
      %46 = sbr.rel (0) target = $region17
    $region16: #{tpu_custom_call.1} parent=1 // pred_region
      %47 = dma.done [#allocation3], 2048
    $region17: #{tpu_custom_call.1} parent=1 // pred_fallthru
      _
    // Predicated region
    $region18: #{tpu_custom_call.1} parent=1 // pred_check
      _
    $region19: #{tpu_custom_call.1} parent=1 // pred_check_branch
      %49 = sbr.rel (0) target = $region21
    $region20: #{tpu_custom_call.1} parent=1 // pred_region
      %50 = dma.done [#allocation6], 1024
    $region21: #{tpu_custom_call.1} parent=1 // pred_fallthru
      _
    // Predicated region
    $region22: #{tpu_custom_call.1} parent=1 // pred_check
      _
    $region23: #{tpu_custom_call.1} parent=1 // pred_check_branch
      %52 = sbr.rel (0) target = $region25
    $region24: #{tpu_custom_call.1} parent=1 // pred_region
      %53 = dma.done [#allocation6], 128
    $region25: #{tpu_custom_call.1} parent=1 // pred_fallthru
      _
    %v55 = vld [vmem:[#allocation2] sm:$0xff]
    %v56 = vld [vmem:[#allocation2 + $0x8] sm:$0xff]
    %v57 = vld [vmem:[#allocation2 + $0x10] sm:$0xff]
    %v58 = vld [vmem:[#allocation2 + $0x18] sm:$0xff]
    %v59 = vld [vmem:[#allocation2 + $0x20] sm:$0xff]
    %v60 = vld [vmem:[#allocation2 + $0x28] sm:$0xff]
    %v61 = vld [vmem:[#allocation2 + $0x30] sm:$0xff]
    %v62 = vld [vmem:[#allocation2 + $0x38] sm:$0xff]
    %v63 = vld [vmem:[#allocation2 + $0x40] sm:$0xff]
    %v64 = vld [vmem:[#allocation2 + $0x48] sm:$0xff]
    %v65 = vld [vmem:[#allocation2 + $0x50] sm:$0xff]
    %v66 = vld [vmem:[#allocation2 + $0x58] sm:$0xff]
    %v67 = vld [vmem:[#allocation2 + $0x60] sm:$0xff]
    %v68 = vld [vmem:[#allocation2 + $0x68] sm:$0xff]
    %v69 = vld [vmem:[#allocation2 + $0x70] sm:$0xff]
    %v70 = vld [vmem:[#allocation2 + $0x78] sm:$0xff]
    %v71 = vpack.c.bf16 %v56, %v55
    %v72 = vpack.c.bf16 %v58, %v57
    %v73 = vpack.c.bf16 %v60, %v59
    %v74 = vpack.c.bf16 %v62, %v61
    %v75 = vpack.c.bf16 %v64, %v63
    %v76 = vpack.c.bf16 %v66, %v65
    %v77 = vpack.c.bf16 %v68, %v67
    %v78 = vpack.c.bf16 %v70, %v69
    %v79 = vld [vmem:[#allocation5] sm:$0xf]
    %v80 = vld [vmem:[#allocation5 + $0x4] sm:$0xf]
    %v81 = vld [vmem:[#allocation5 + $0x8] sm:$0xf]
    %v82 = vld [vmem:[#allocation5 + $0xc] sm:$0xf]
    %v83 = vld [vmem:[#allocation5 + $0x10] sm:$0xf]
    %v84 = vld [vmem:[#allocation5 + $0x14] sm:$0xf]
    %v85 = vld [vmem:[#allocation5 + $0x18] sm:$0xf]
    %v86 = vld [vmem:[#allocation5 + $0x1c] sm:$0xf]
    %v87 = vld [vmem:[#allocation5 + $0x20] sm:$0xf]
    %v88 = vld [vmem:[#allocation5 + $0x24] sm:$0xf]
    %v89 = vld [vmem:[#allocation5 + $0x28] sm:$0xf]
    %v90 = vld [vmem:[#allocation5 + $0x2c] sm:$0xf]
    %v91 = vld [vmem:[#allocation5 + $0x30] sm:$0xf]
    %v92 = vld [vmem:[#allocation5 + $0x34] sm:$0xf]
    %v93 = vld [vmem:[#allocation5 + $0x38] sm:$0xf]
    %v94 = vld [vmem:[#allocation5 + $0x3c] sm:$0xf]
    %v95 = vld [vmem:[#allocation7] sm:$0x1]
    %v96 = vlaneseq
    %v97 = vshrl.u32 %v96, 7
    %v98 = vsub.s32 0, %v97
    %v99 = vrot.slane %v95, %v98
    %v116 = vunpack.c.l.b16 %v79
    %v117 = vunpack.c.l.b16 %v80
    %v118 = vunpack.c.l.b16 %v81
    %v119 = vunpack.c.l.b16 %v82
    %v120 = vunpack.c.l.b16 %v83
    %v121 = vunpack.c.l.b16 %v84
    %v122 = vunpack.c.l.b16 %v85
    %v123 = vunpack.c.l.b16 %v86
    %v124 = vunpack.c.l.b16 %v87
    %v125 = vunpack.c.l.b16 %v88
    %v126 = vunpack.c.l.b16 %v89
    %v127 = vunpack.c.l.b16 %v90
    %v128 = vunpack.c.l.b16 %v91
    %v129 = vunpack.c.l.b16 %v92
    %v130 = vunpack.c.l.b16 %v93
    %v131 = vunpack.c.l.b16 %v94
    %v132 = vpack.c.b16 %v117, %v116
    %v133 = vpack.c.b16 %v119, %v118
    %v134 = vpack.c.b16 %v121, %v120
    %v135 = vpack.c.b16 %v123, %v122
    %v136 = vpack.c.b16 %v125, %v124
    %v137 = vpack.c.b16 %v127, %v126
    %v138 = vpack.c.b16 %v129, %v128
    %v139 = vpack.c.b16 %v131, %v130
    %148 = vmatprep.subr.bf16.mxu0 0
    %149 = vmatpush1.bf16.msra.mxu0 %v132
    %150 = vmatprep.subr.bf16.mxu0 0
    %151 = vmatpush1.bf16.msra.mxu0 %v133
    %152 = vmatprep.subr.bf16.mxu0 0
    %153 = vmatpush1.bf16.msra.mxu0 %v134
    %154 = vmatprep.subr.bf16.mxu0 0
    %155 = vmatpush1.bf16.msra.mxu0 %v135
    %156 = vmatprep.subr.bf16.mxu0 0
    %157 = vmatpush1.bf16.msra.mxu0 %v136
    %158 = vmatprep.subr.bf16.mxu0 0
    %159 = vmatpush1.bf16.msra.mxu0 %v137
    %160 = vmatprep.subr.bf16.mxu0 0
    %161 = vmatpush1.bf16.msra.mxu0 %v138
    %162 = vmatprep.subr.bf16.mxu0 0
    %163 = vmatpush1.bf16.msra.mxu0 %v139
    %164 = vmatprep.subr.bf16.mxu0 0
    %165 = vmatpush1.bf16.msra.mxu0 0
    %166 = vmatprep.subr.bf16.mxu0 0
    %167 = vmatpush1.bf16.msra.mxu0 0
    %168 = vmatprep.subr.bf16.mxu0 0
    %169 = vmatpush1.bf16.msra.mxu0 0
    %170 = vmatprep.subr.bf16.mxu0 0
    %171 = vmatpush1.bf16.msra.mxu0 0
    %172 = vmatprep.subr.bf16.mxu0 0
    %173 = vmatpush1.bf16.msra.mxu0 0
    %174 = vmatprep.subr.bf16.mxu0 0
    %175 = vmatpush1.bf16.msra.mxu0 0
    %176 = vmatprep.subr.bf16.mxu0 0
    %177 = vmatpush1.bf16.msra.mxu0 0
    %178 = vmatprep.subr.bf16.mxu0 0
    %179 = vmatpush1.bf16.msra.mxu0 0
    %180 = vmatprep.mubr.bf16.mxu0 0
    %181 = vmatmul.mubr.bf16.gmra.mrb[0].mxu0 %v71
    %v182 = vpop.f32.mrb[0].mxu0
    %v183 = vadd.f32 %v99, %v182
    %v184 = vpop.f32.mrb[0].mxu0
    %v185 = vpop.f32.mrb[0].mxu0
    %v186 = vadd.f32 %v99, %v185
    %v187 = vpop.f32.mrb[0].mxu0
    %188 = vmatprep.mubr.bf16.mxu0 0
    %189 = vmatmul.mubr.bf16.gmra.mrb[0].mxu0 %v72
    %v190 = vpop.f32.mrb[0].mxu0
    %v191 = vadd.f32 %v99, %v190
    %v192 = vpop.f32.mrb[0].mxu0
    %v193 = vpop.f32.mrb[0].mxu0
    %v194 = vadd.f32 %v99, %v193
    %v195 = vpop.f32.mrb[0].mxu0
    %196 = vmatprep.mubr.bf16.mxu0 0
    %197 = vmatmul.mubr.bf16.gmra.mrb[0].mxu0 %v73
    %v198 = vpop.f32.mrb[0].mxu0
    %v199 = vadd.f32 %v99, %v198
    %v200 = vpop.f32.mrb[0].mxu0
    %v201 = vpop.f32.mrb[0].mxu0
    %v202 = vadd.f32 %v99, %v201
    %v203 = vpop.f32.mrb[0].mxu0
    %204 = vmatprep.mubr.bf16.mxu0 0
    %205 = vmatmul.mubr.bf16.gmra.mrb[0].mxu0 %v74
    %v206 = vpop.f32.mrb[0].mxu0
    %v207 = vadd.f32 %v99, %v206
    %v208 = vpop.f32.mrb[0].mxu0
    %v209 = vpop.f32.mrb[0].mxu0
    %v210 = vadd.f32 %v99, %v209
    %v211 = vpop.f32.mrb[0].mxu0
    %212 = vmatprep.mubr.bf16.mxu0 0
    %213 = vmatmul.mubr.bf16.gmra.mrb[0].mxu0 %v75
    %v214 = vpop.f32.mrb[0].mxu0
    %v215 = vadd.f32 %v99, %v214
    %v216 = vpop.f32.mrb[0].mxu0
    %v217 = vpop.f32.mrb[0].mxu0
    %v218 = vadd.f32 %v99, %v217
    %v219 = vpop.f32.mrb[0].mxu0
    %220 = vmatprep.mubr.bf16.mxu0 0
    %221 = vmatmul.mubr.bf16.gmra.mrb[0].mxu0 %v76
    %v222 = vpop.f32.mrb[0].mxu0
    %v223 = vadd.f32 %v99, %v222
    %v224 = vpop.f32.mrb[0].mxu0
    %v225 = vpop.f32.mrb[0].mxu0
    %v226 = vadd.f32 %v99, %v225
    %v227 = vpop.f32.mrb[0].mxu0
    %228 = vmatprep.mubr.bf16.mxu0 0
    %229 = vmatmul.mubr.bf16.gmra.mrb[0].mxu0 %v77
    %v230 = vpop.f32.mrb[0].mxu0
    %v231 = vadd.f32 %v99, %v230
    %v232 = vpop.f32.mrb[0].mxu0
    %v233 = vpop.f32.mrb[0].mxu0
    %v234 = vadd.f32 %v99, %v233
    %v235 = vpop.f32.mrb[0].mxu0
    %236 = vmatprep.mubr.bf16.mxu0 0
    %237 = vmatmul.mubr.bf16.gmra.mrb[0].mxu0 %v78
    %v238 = vpop.f32.mrb[0].mxu0
    %v239 = vadd.f32 %v99, %v238
    %v240 = vpop.f32.mrb[0].mxu0
    %v241 = vpop.f32.mrb[0].mxu0
    %v242 = vadd.f32 %v99, %v241
    %v243 = vpop.f32.mrb[0].mxu0
    %244 = vdwg.mxu0
    %v245 = vpack.c.bf16 %v186, %v183
    %v246 = vpack.c.bf16 %v194, %v191
    %v247 = vpack.c.bf16 %v202, %v199
    %v248 = vpack.c.bf16 %v210, %v207
    %v249 = vpack.c.bf16 %v218, %v215
    %v250 = vpack.c.bf16 %v226, %v223
    %v251 = vpack.c.bf16 %v234, %v231
    %v252 = vpack.c.bf16 %v242, %v239
    %v261 = vunpack.c.l.b16 %v245
    %v262 = vunpack.c.h.b16 %v245
    %v263 = vunpack.c.l.b16 %v246
    %v264 = vunpack.c.h.b16 %v246
    %v265 = vunpack.c.l.b16 %v247
    %v266 = vunpack.c.h.b16 %v247
    %v267 = vunpack.c.l.b16 %v248
    %v268 = vunpack.c.h.b16 %v248
    %v269 = vunpack.c.l.b16 %v249
    %v270 = vunpack.c.h.b16 %v249
    %v271 = vunpack.c.l.b16 %v250
    %v272 = vunpack.c.h.b16 %v250
    %v273 = vunpack.c.l.b16 %v251
    %v274 = vunpack.c.h.b16 %v251
    %v275 = vunpack.c.l.b16 %v252
    %v276 = vunpack.c.h.b16 %v252
    %v277 = vpack.c.b16 %v261, %v261
    %v278 = vpack.c.b16 %v262, %v262
    %v279 = vpack.c.b16 %v263, %v263
    %v280 = vpack.c.b16 %v264, %v264
    %v281 = vpack.c.b16 %v265, %v265
    %v282 = vpack.c.b16 %v266, %v266
    %v283 = vpack.c.b16 %v267, %v267
    %v284 = vpack.c.b16 %v268, %v268
    %v285 = vpack.c.b16 %v269, %v269
    %v286 = vpack.c.b16 %v270, %v270
    %v287 = vpack.c.b16 %v271, %v271
    %v288 = vpack.c.b16 %v272, %v272
    %v289 = vpack.c.b16 %v273, %v273
    %v290 = vpack.c.b16 %v274, %v274
    %v291 = vpack.c.b16 %v275, %v275
    %v292 = vpack.c.b16 %v276, %v276
    %309 = vst [vmem:[#allocation8] sm:$0xf] %v277
    %310 = vst [vmem:[#allocation8 + $0x4] sm:$0xf] %v278
    %311 = vst [vmem:[#allocation8 + $0x8] sm:$0xf] %v279
    %312 = vst [vmem:[#allocation8 + $0xc] sm:$0xf] %v280
    %313 = vst [vmem:[#allocation8 + $0x10] sm:$0xf] %v281
    %314 = vst [vmem:[#allocation8 + $0x14] sm:$0xf] %v282
    %315 = vst [vmem:[#allocation8 + $0x18] sm:$0xf] %v283
    %316 = vst [vmem:[#allocation8 + $0x1c] sm:$0xf] %v284
    %317 = vst [vmem:[#allocation8 + $0x20] sm:$0xf] %v285
    %318 = vst [vmem:[#allocation8 + $0x24] sm:$0xf] %v286
    %319 = vst [vmem:[#allocation8 + $0x28] sm:$0xf] %v287
    %320 = vst [vmem:[#allocation8 + $0x2c] sm:$0xf] %v288
    %321 = vst [vmem:[#allocation8 + $0x30] sm:$0xf] %v289
    %322 = vst [vmem:[#allocation8 + $0x34] sm:$0xf] %v290
    %323 = vst [vmem:[#allocation8 + $0x38] sm:$0xf] %v291
    %324 = vst [vmem:[#allocation8 + $0x3c] sm:$0xf] %v292
    // Predicated region
    $region26: #{tpu_custom_call.1} parent=1 // pred_check
      _
    $region27: #{tpu_custom_call.1} parent=1 // pred_check_branch
      %326 = sbr.rel (0) target = $region29
    $region28: #{tpu_custom_call.1} parent=1 // pred_region
      %s328 = ssub.s32 1024, 1024
      %329 = vsyncadd [#allocation4], %s328
      %s330 = sshll.u32 [#allocation8], 4
      %s331 = int_to_ptr.vmem [resolvable:$true] %s330
      %336 = dma.vmem_to_hbm [thread:$0]  %s331, 1024, %s3, [#allocation4], 64, 64, 4
    $region29: #{tpu_custom_call.1} parent=1 // pred_fallthru
      _
    // Predicated region
    $region30: #{tpu_custom_call.1} parent=1 // pred_check
      _
    $region31: #{tpu_custom_call.1} parent=1 // pred_check_branch
      %338 = sbr.rel (0) target = $region33
    $region32: #{tpu_custom_call.1} parent=1 // pred_region
      %339 = dma.done [#allocation4], 1024
    $region33: #{tpu_custom_call.1} parent=1 // pred_fallthru
      _
    %340 = vsyncpa [#allocation3], 1
    %341 = vsyncpa [#allocation6], 1
    %342 = vsyncpa [#allocation4], 1

</llo_original>
